<compile_context>
chip_gen: v6e
topology: v6e:2x2x1
jax: 0.10.0
libtpu: 0.0.40
codegen_flags: <defaults>
</compile_context>

<pallas_src>
import functools

import jax
import jax.numpy as jnp
from jax import lax
from jax.experimental import pallas as pl
from jax.experimental.pallas import tpu as pltpu


def _span_pool_fc_kernel(pos_ref,    # VMEM (Bt, 2, P_pad) int32: [src; end]
                         feat_ref,   # VMEM (Bt, S, H) bf16
                         w_ref,      # VMEM (1, H) bf16 fc weight
                         out_ref,    # VMEM (Bt, 1, P_pad) f32
                         *, seq_len, p_pad, block_b):
    # Hoisted once per grid step (not re-built per batch item).
    tok = lax.broadcasted_iota(jnp.int32, (seq_len, p_pad), 0)     # (S, P_pad)
    w = w_ref[...]                                                  # (1, H)

    def per_item(i, carry):
        feat = feat_ref[i]                                          # (S, H)
        pos = pos_ref[i]                                            # (2, P_pad)
        src = pos[0:1, :]                                           # (1, P_pad)
        end = pos[1:2, :]                                           # (1, P_pad)

        # Per-token logit for this batch item: one MXU matmul, contraction
        # over H (flash-style A·Bᵀ form).  -> (1, S), f32 accumulate.
        tok_logit = lax.dot_general(
            w, feat,
            dimension_numbers=(((1,), (1,)), ((), ())),
            preferred_element_type=jnp.float32)

        # Binary span membership mask; scaling by 1/count moved AFTER the
        # matmul (post-scale the (1, P_pad) row instead of an (S, P_pad) select).
        in_span = ((tok >= src) & (tok <= end)).astype(jnp.float32)  # (S, P_pad)

        # Second MXU matmul: (1, S) @ (S, P_pad) -> span sum-logits, one
        # lane-dense row per item.
        span_sum = jnp.dot(tok_logit, in_span,
                           preferred_element_type=jnp.float32)       # (1, P_pad)
        inv_count = 1.0 / (end - src + 1).astype(jnp.float32)        # (1, P_pad)
        out_ref[i] = (span_sum * inv_count).astype(out_ref.dtype)
        return carry

    lax.fori_loop(0, block_b, per_item, 0, unroll=True)


def _choose_block_b(batch, per_item_bytes):
    """Batch items per grid step: amortize ~0.35us/step overhead, cap VMEM,
    and keep >= 2 grid steps so v7x's two TensorCores both get work."""
    vmem_budget = 12 * 1024 * 1024          # per buffer; x2 double-buffered ~24 MiB
    cap = min(8, batch, max(1, vmem_budget // max(per_item_bytes, 1)))
    for bt in range(cap, 0, -1):
        if batch % bt == 0 and batch // bt >= 2:
            return bt
    for bt in range(cap, 0, -1):
        if batch % bt == 0:
            return bt
    return 1


def dictionary_wise_forward(feature, position_list, fc_weight, fc_bias):
    """
    feature:       [B, S, H] float    (stand-in for DeBERTa last_hidden_state)
    position_list: [B, P, 2] int32    ((src, end) inclusive spans per notebook)
    fc_weight:     [1, H]    float    (nn.Linear(H, 1).weight)
    fc_bias:       [1]       float
    returns:       [B*P, 1]  float32  (one logit per span, batch-major order)
    """
    B, S, H = feature.shape
    P = position_list.shape[1]
    p_pad = max(128, ((P + 127) // 128) * 128)     # lane-dense output width

    # bf16 halves HBM traffic on the roofline-dominant feature read; both
    # matmuls still accumulate in f32.  (In production the backbone should
    # already emit bf16, making this cast free.)
    feat_bf16 = feature.astype(jnp.bfloat16)
    w = fc_weight.astype(jnp.bfloat16)

    bt = _choose_block_b(B, S * H * 2)             # bf16 bytes per batch item

    # (B, P, 2) -> (B, 2, P_pad); padded spans are (0, 0) => count 1, finite
    # garbage output, sliced off below.
    pos = jnp.transpose(position_list.astype(jnp.int32), (0, 2, 1))
    pos = jnp.pad(pos, ((0, 0), (0, 0), (0, p_pad - P)))

    kernel = functools.partial(_span_pool_fc_kernel,
                               seq_len=S, p_pad=p_pad, block_b=bt)

    grid_spec = pltpu.PrefetchScalarGridSpec(
        num_scalar_prefetch=0,
        grid=(B // bt,),
        in_specs=[
            pl.BlockSpec((bt, 2, p_pad), lambda g: (g, 0, 0)),   # span table
            pl.BlockSpec((bt, S, H), lambda g: (g, 0, 0)),       # feature tile
            pl.BlockSpec((1, H), lambda g: (0, 0)),              # fc weight
        ],
        out_specs=pl.BlockSpec((bt, 1, p_pad), lambda g: (g, 0, 0)),
    )

    out = pl.pallas_call(
        kernel,
        out_shape=jax.ShapeDtypeStruct((B, 1, p_pad), jnp.float32),
        grid_spec=grid_spec,
        compiler_params=pltpu.CompilerParams(
            dimension_semantics=("parallel",),      # each step owns its rows
            vmem_limit_bytes=32 * 1024 * 1024),
    )(pos, feat_bf16, w)

    # Drop padded spans, add fc bias here (cheaper than a per-step (1,1) VMEM
    # tile), restore PyTorch concat order (batch-major, span-minor).
    return (out[:, 0, :P] + fc_bias[0]).reshape(B * P, 1)


def _reference(feature, position_list, fc_weight, fc_bias):
    """Pure-JAX (f32) mirror of the PyTorch nested loops for verification."""
    logits = []
    for i in range(feature.shape[0]):
        for idx in range(position_list.shape[1]):
            src = int(position_list[i, idx, 0])
            end = int(position_list[i, idx, 1])
            emb = jnp.mean(feature[i, src:end + 1, :], axis=0)        # pooling
            logits.append(jnp.dot(fc_weight[0], emb) + fc_bias[0])    # fc
    return jnp.stack(logits).reshape(-1, 1)


if __name__ == "__main__":
    # TODO(synk): DeBERTa-V3 backbone (self.model) is not implemented; `feature`
    # below stands in for outputs.last_hidden_state.
    B, S, H, P = 4, 16, 32, 3   # batch, seq, hidden, spans-per-notebook

    key = jax.random.PRNGKey(0)
    k_feat, k_w, k_b = jax.random.split(key, 3)

    feature = jax.random.normal(k_feat, (B, S, H), dtype=jnp.float32)
    # nn.Linear(hidden_size, 1): weight (1, H), bias (1,)
    fc_weight = jax.random.normal(k_w, (1, H), dtype=jnp.float32) * 0.02
    fc_bias = jax.random.normal(k_b, (1,), dtype=jnp.float32) * 0.02

    # deterministic (src, end) inclusive spans, all valid within [0, S)
    position_list = jnp.array(
        [[[0, 3], [4, 9], [10, 15]],
         [[2, 2], [5, 11], [12, 14]],
         [[0, 0], [1, 7], [8, 15]],
         [[3, 6], [7, 7], [9, 13]]], dtype=jnp.int32)

    pred = dictionary_wise_forward(feature, position_list, fc_weight, fc_bias)
    pred = jax.block_until_ready(pred)

    ref = _reference(feature, position_list, fc_weight, fc_bias)
    assert pred.shape == (B * P, 1), pred.shape
    # bf16 feature path: loosen tolerance vs. the f32 reference
    assert jnp.allclose(pred, ref, atol=2e-2, rtol=2e-2), (pred, ref)

    print("KERNEL_OK")
</pallas_src>

<mosaic_0001>
module attributes {stable_mosaic.version = 11 : i64} {
  func.func @_span_pool_fc_kernel(%arg0: i32, %arg1: memref<2x2x128xi32, #tpu.memory_space<vmem>>, %arg2: memref<2x16x32xbf16, #tpu.memory_space<vmem>>, %arg3: memref<1x32xbf16, #tpu.memory_space<vmem>>, %arg4: memref<2x1x128xf32, #tpu.memory_space<vmem>>) attributes {dimension_semantics = [#tpu.dimension_semantics<parallel>], iteration_bounds = array<i64: 2>, scalar_prefetch = 0 : i64, scratch_operands = 0 : i64, tpu.core_type = #tpu.core_type<tc>, window_params = [{transform_indices = @transform_0, window_bounds = array<i64: 2, 2, 128>}, {transform_indices = @transform_1, window_bounds = array<i64: 2, 16, 32>}, {pipeline_mode = #tpu.pipeline_mode<synchronous>, transform_indices = @transform_2, window_bounds = array<i64: 1, 32>}, {transform_indices = @transform_3, window_bounds = array<i64: 2, 1, 128>}]} {
    %0 = tpu.iota {dimensions = array<i32: 0>} : vector<16x128xi32>
    %c0 = arith.constant 0 : index
    %c0_0 = arith.constant 0 : index
    %1 = vector.load %arg3[%c0, %c0_0] : memref<1x32xbf16, #tpu.memory_space<vmem>>, vector<1x32xbf16>
    %c0_i32 = arith.constant 0 : i32
    %2 = arith.index_cast %c0_i32 : i32 to index
    %c0_1 = arith.constant 0 : index
    %c0_2 = arith.constant 0 : index
    %3 = vector.load %arg2[%2, %c0_1, %c0_2] : memref<2x16x32xbf16, #tpu.memory_space<vmem>>, vector<1x16x32xbf16>
    %4 = vector.shape_cast %3 : vector<1x16x32xbf16> to vector<16x32xbf16>
    %5 = arith.index_cast %c0_i32 : i32 to index
    %c0_3 = arith.constant 0 : index
    %c0_4 = arith.constant 0 : index
    %6 = vector.load %arg1[%5, %c0_3, %c0_4] : memref<2x2x128xi32, #tpu.memory_space<vmem>>, vector<1x2x128xi32>
    %7 = vector.shape_cast %6 : vector<1x2x128xi32> to vector<2x128xi32>
    %8 = vector.extract_strided_slice %7 {offsets = [0, 0], sizes = [1, 128], strides = [1, 1]} : vector<2x128xi32> to vector<1x128xi32>
    %9 = vector.extract_strided_slice %7 {offsets = [1, 0], sizes = [1, 128], strides = [1, 1]} : vector<2x128xi32> to vector<1x128xi32>
    %cst = arith.constant dense<0.000000e+00> : vector<1x16xf32>
    %10 = tpu.matmul %1, %4, %cst {dimension_numbers = #tpu.dot_dimension_numbers<[1], [1], [0], [0], [0, 0, 1, 0], [], []>} : vector<1x32xbf16>, vector<16x32xbf16>, vector<1x16xf32> -> vector<1x16xf32>
    %11 = vector.broadcast %8 : vector<1x128xi32> to vector<16x128xi32>
    %12 = arith.cmpi sge, %0, %11 : vector<16x128xi32>
    %13 = vector.broadcast %9 : vector<1x128xi32> to vector<16x128xi32>
    %14 = arith.cmpi sle, %0, %13 : vector<16x128xi32>
    %15 = arith.andi %12, %14 : vector<16x128xi1>
    %16 = arith.extui %15 : vector<16x128xi1> to vector<16x128xi32>
    %17 = arith.sitofp %16 : vector<16x128xi32> to vector<16x128xf32>
    %cst_5 = arith.constant dense<0.000000e+00> : vector<1x128xf32>
    %18 = tpu.matmul %10, %17, %cst_5 {dimension_numbers = #tpu.dot_dimension_numbers<[1], [0], [0], [1], [0, 0, 1, 1], [], []>} : vector<1x16xf32>, vector<16x128xf32>, vector<1x128xf32> -> vector<1x128xf32>
    %19 = arith.subi %9, %8 : vector<1x128xi32>
    %c1_i32 = arith.constant 1 : i32
    %20 = vector.broadcast %c1_i32 : i32 to vector<1x128xi32>
    %21 = arith.addi %19, %20 : vector<1x128xi32>
    %22 = arith.sitofp %21 : vector<1x128xi32> to vector<1x128xf32>
    %cst_6 = arith.constant 1.000000e+00 : f32
    %23 = vector.broadcast %cst_6 : f32 to vector<1x128xf32>
    %24 = arith.divf %23, %22 : vector<1x128xf32>
    %25 = arith.mulf %18, %24 : vector<1x128xf32>
    %26 = arith.index_cast %c0_i32 : i32 to index
    %c0_7 = arith.constant 0 : index
    %c0_8 = arith.constant 0 : index
    %27 = vector.load %arg4[%26, %c0_7, %c0_8] : memref<2x1x128xf32, #tpu.memory_space<vmem>>, vector<1x1x128xf32>
    %28 = vector.shape_cast %27 : vector<1x1x128xf32> to vector<1x128xf32>
    %29 = vector.shape_cast %25 : vector<1x128xf32> to vector<1x1x128xf32>
    tpu.vector_store %arg4[%26, %c0_7, %c0_8], %29 {strides = array<i32>} : memref<2x1x128xf32, #tpu.memory_space<vmem>>, vector<1x1x128xf32>,
    %c1_i32_9 = arith.constant 1 : i32
    %30 = arith.index_cast %c1_i32_9 : i32 to index
    %c0_10 = arith.constant 0 : index
    %c0_11 = arith.constant 0 : index
    %31 = vector.load %arg2[%30, %c0_10, %c0_11] : memref<2x16x32xbf16, #tpu.memory_space<vmem>>, vector<1x16x32xbf16>
    %32 = vector.shape_cast %31 : vector<1x16x32xbf16> to vector<16x32xbf16>
    %33 = arith.index_cast %c1_i32_9 : i32 to index
    %c0_12 = arith.constant 0 : index
    %c0_13 = arith.constant 0 : index
    %34 = vector.load %arg1[%33, %c0_12, %c0_13] : memref<2x2x128xi32, #tpu.memory_space<vmem>>, vector<1x2x128xi32>
    %35 = vector.shape_cast %34 : vector<1x2x128xi32> to vector<2x128xi32>
    %36 = vector.extract_strided_slice %35 {offsets = [0, 0], sizes = [1, 128], strides = [1, 1]} : vector<2x128xi32> to vector<1x128xi32>
    %37 = vector.extract_strided_slice %35 {offsets = [1, 0], sizes = [1, 128], strides = [1, 1]} : vector<2x128xi32> to vector<1x128xi32>
    %cst_14 = arith.constant dense<0.000000e+00> : vector<1x16xf32>
    %38 = tpu.matmul %1, %32, %cst_14 {dimension_numbers = #tpu.dot_dimension_numbers<[1], [1], [0], [0], [0, 0, 1, 0], [], []>} : vector<1x32xbf16>, vector<16x32xbf16>, vector<1x16xf32> -> vector<1x16xf32>
    %39 = vector.broadcast %36 : vector<1x128xi32> to vector<16x128xi32>
    %40 = arith.cmpi sge, %0, %39 : vector<16x128xi32>
    %41 = vector.broadcast %37 : vector<1x128xi32> to vector<16x128xi32>
    %42 = arith.cmpi sle, %0, %41 : vector<16x128xi32>
    %43 = arith.andi %40, %42 : vector<16x128xi1>
    %44 = arith.extui %43 : vector<16x128xi1> to vector<16x128xi32>
    %45 = arith.sitofp %44 : vector<16x128xi32> to vector<16x128xf32>
    %cst_15 = arith.constant dense<0.000000e+00> : vector<1x128xf32>
    %46 = tpu.matmul %38, %45, %cst_15 {dimension_numbers = #tpu.dot_dimension_numbers<[1], [0], [0], [1], [0, 0, 1, 1], [], []>} : vector<1x16xf32>, vector<16x128xf32>, vector<1x128xf32> -> vector<1x128xf32>
    %47 = arith.subi %37, %36 : vector<1x128xi32>
    %c1_i32_16 = arith.constant 1 : i32
    %48 = vector.broadcast %c1_i32_16 : i32 to vector<1x128xi32>
    %49 = arith.addi %47, %48 : vector<1x128xi32>
    %50 = arith.sitofp %49 : vector<1x128xi32> to vector<1x128xf32>
    %cst_17 = arith.constant 1.000000e+00 : f32
    %51 = vector.broadcast %cst_17 : f32 to vector<1x128xf32>
    %52 = arith.divf %51, %50 : vector<1x128xf32>
    %53 = arith.mulf %46, %52 : vector<1x128xf32>
    %54 = arith.index_cast %c1_i32_9 : i32 to index
    %c0_18 = arith.constant 0 : index
    %c0_19 = arith.constant 0 : index
    %55 = vector.load %arg4[%54, %c0_18, %c0_19] : memref<2x1x128xf32, #tpu.memory_space<vmem>>, vector<1x1x128xf32>
    %56 = vector.shape_cast %55 : vector<1x1x128xf32> to vector<1x128xf32>
    %57 = vector.shape_cast %53 : vector<1x128xf32> to vector<1x1x128xf32>
    tpu.vector_store %arg4[%54, %c0_18, %c0_19], %57 {strides = array<i32>} : memref<2x1x128xf32, #tpu.memory_space<vmem>>, vector<1x1x128xf32>,
    %c2_i32 = arith.constant 2 : i32
    return
  }
  func.func @transform_0(%arg0: i32) -> (i32, i32, i32) {
    %c0_i32 = arith.constant 0 : i32
    %c0_i32_0 = arith.constant 0 : i32
    %c0_i32_1 = arith.constant 0 : i32
    return %arg0, %c0_i32, %c0_i32_0 : i32, i32, i32
  }
  func.func @transform_1(%arg0: i32) -> (i32, i32, i32) {
    %c0_i32 = arith.constant 0 : i32
    %c0_i32_0 = arith.constant 0 : i32
    %c0_i32_1 = arith.constant 0 : i32
    return %arg0, %c0_i32, %c0_i32_0 : i32, i32, i32
  }
  func.func @transform_2(%arg0: i32) -> (i32, i32) {
    %c0_i32 = arith.constant 0 : i32
    %c0_i32_0 = arith.constant 0 : i32
    %c0_i32_1 = arith.constant 0 : i32
    return %c0_i32, %c0_i32_0 : i32, i32
  }
  func.func @transform_3(%arg0: i32) -> (i32, i32, i32) {
    %c0_i32 = arith.constant 0 : i32
    %c0_i32_0 = arith.constant 0 : i32
    %c0_i32_1 = arith.constant 0 : i32
    return %arg0, %c0_i32, %c0_i32_0 : i32, i32, i32
  }
}

</mosaic_0001>

<llo_original>
// kernel: tpu_custom_call.1
$region0: #{tpu_custom_call.1}
  #allocation0 [shape = 'u32[]', space=smem, size = 0x4, offset = 0x4, fixed_abs, tag = 'smem constant byte address 0x4 - core index']
  #allocation1 [shape = 'u32[144,128]{1,0:T(1,128)}', space=vmem, size = 0x12000, scoped, tag = 'internal scratch']
  %s0 = inlined_call_operand.hbm [shape: s32[4,2,128], index: 0, kind: input, shape index: {}]
  %s1 = inlined_call_operand.hbm [shape: bf16[4,16,32], index: 1, kind: input, shape index: {}]
  %s2 = inlined_call_operand.vmem [shape: bf16[1,32], index: 2, kind: input, shape index: {}]
  %s3 = inlined_call_operand.hbm [shape: f32[4,1,128], index: 3, kind: output, shape index: {}]
  %s4 = sld [smem:[#allocation0]]
  $region53: #{tpu_custom_call.1} parent=0
    _
  %s6 = ssub.s32 1, %s4
  %s7 = scalar_select 0, %s6, %s4
  $region1: #{tpu_custom_call.1} parent=0
    #allocation2 [shape = 'u8[4096]{0}', space=vmem, size = 0x1000, scoped, tag = 'input window, operand 0']
    #allocation3 [shape = 's32[2]{0}', space=sflag, size = 0x8, scoped, tag = 'scoped memory for tpu_custom_call.1']
    #allocation4 [shape = 's32[2]{0}', space=sflag, size = 0x8, scoped, tag = 'scoped memory for tpu_custom_call.1']
    #allocation5 [shape = 'u8[16384]{0}', space=vmem, size = 0x4000, scoped, tag = 'input window, operand 1']
    #allocation6 [shape = 's32[2]{0}', space=sflag, size = 0x8, scoped, tag = 'scoped memory for tpu_custom_call.1']
    #allocation7 [shape = 'u8[2048]{0}', space=vmem, size = 0x800, scoped, tag = 'output window, operand 0']
    %8 = vsyncpa [#allocation3], 0
    %s9 = scalar_lea.sflag [#allocation3], 1
    %10 = vsyncpa %s9, 0
    %11 = vsyncpa [#allocation6], 0
    %s12 = scalar_lea.sflag [#allocation6], 1
    %13 = vsyncpa %s12, 0
    %14 = vsyncpa [#allocation4], 0
    %s15 = scalar_lea.sflag [#allocation4], 1
    %16 = vsyncpa %s15, 0
    loop: start=0, step=1, limit=4
    $region2: #{tpu_custom_call.1} parent=1 // loop_pre_header
      _
    $region3: #{tpu_custom_call.1} parent=1 // loop_header
      %s18 = sphi 0, %s22
      %p19 = scmp.ge.s32.totalorder %s18, 4
      %s28 = sphi 0, %s30
      %s31 = sphi 0, %s28
      %s32 = sphi 0, %s31
      %s48 = sphi 0, %s32
      %s54 = sphi 0, %s56
      %s57 = sphi 0, %s54
      %s58 = sphi 0, %s57
      %s74 = sphi 0, %s58
      %s78 = sphi 0, %s78
      %s80 = sphi 0, %s78
      %s81 = sphi 0, %s80
      %s95 = sphi 0, %s81
      %s101 = sphi 0, %s103
      %s104 = sphi 0, %s101
      %s105 = sphi 0, %s104
      %s121 = sphi 0, %s105
    $region4: #{tpu_custom_call.1} parent=1 // loop_header_branch
      %21 = sbr.rel (%p19) target = $region8
    $region5: #{tpu_custom_call.1} parent=1 // loop_body
      %s23 = ssub.s32 %s18, 1
      %s24 = ssub.s32 %s18, 2
      %s25 = sadd.s32 %s18, 1
      %s26 = ssub.s32 %s18, %s25
      %p27 = scmp.eq.s32.totalorder %s26, 0
      %s29 = sadd.s32 %s28, 1
      %s30 = scalar_select %p27, %s28, %s29
      %p33 = pneg %p27
      %p34 = scmp.eq.s32.totalorder %s18, 1
      %p35 = por %p33, %p34
      %p36 = scmp.ne.s32.totalorder %s28, %s31
      %p37 = scmp.eq.s32.totalorder %s18, 0
      %p38 = por %p36, %p37
      %p39 = scmp.ne.s32.totalorder %s28, %s31
      %p40 = scmp.eq.s32.totalorder %s23, 1
      %p41 = por %p39, %p40
      %p42 = scmp.ne.s32.totalorder %s31, %s32
      %p43 = scmp.eq.s32.totalorder %s23, 0
      %p44 = por %p42, %p43
      %p45 = scmp.ne.s32.totalorder %s31, %s32
      %p46 = scmp.eq.s32.totalorder %s24, 1
      %p47 = por %p45, %p46
      %p49 = scmp.ne.s32.totalorder %s32, %s48
      %p50 = scmp.eq.s32.totalorder %s24, 0
      %p51 = por %p49, %p50
      %s52 = ssub.s32 %s18, %s25
      %p53 = scmp.eq.s32.totalorder %s52, 0
      %s55 = sadd.s32 %s54, 1
      %s56 = scalar_select %p53, %s54, %s55
      %p59 = pneg %p53
      %p60 = scmp.eq.s32.totalorder %s18, 1
      %p61 = por %p59, %p60
      %p62 = scmp.ne.s32.totalorder %s54, %s57
      %p63 = scmp.eq.s32.totalorder %s18, 0
      %p64 = por %p62, %p63
      %p65 = scmp.ne.s32.totalorder %s54, %s57
      %p66 = scmp.eq.s32.totalorder %s23, 1
      %p67 = por %p65, %p66
      %p68 = scmp.ne.s32.totalorder %s57, %s58
      %p69 = scmp.eq.s32.totalorder %s23, 0
      %p70 = por %p68, %p69
      %p71 = scmp.ne.s32.totalorder %s57, %s58
      %p72 = scmp.eq.s32.totalorder %s24, 1
      %p73 = por %p71, %p72
      %p75 = scmp.ne.s32.totalorder %s58, %s74
      %p76 = scmp.eq.s32.totalorder %s24, 0
      %p77 = por %p75, %p76
      %s79 = sadd.s32 %s78, 1
      %p82 = scmp.eq.s32.totalorder %s18, 1
      %p83 = scmp.ne.s32.totalorder %s78, %s80
      %p84 = scmp.eq.s32.totalorder %s18, 0
      %p85 = por %p83, %p84
      %p86 = scmp.ne.s32.totalorder %s78, %s80
      %p87 = scmp.eq.s32.totalorder %s23, 1
      %p88 = por %p86, %p87
      %p89 = scmp.ne.s32.totalorder %s80, %s81
      %p90 = scmp.eq.s32.totalorder %s23, 0
      %p91 = por %p89, %p90
      %p92 = scmp.ne.s32.totalorder %s80, %s81
      %p93 = scmp.eq.s32.totalorder %s24, 1
      %p94 = por %p92, %p93
      %p96 = scmp.ne.s32.totalorder %s81, %s95
      %p97 = scmp.eq.s32.totalorder %s24, 0
      %p98 = por %p96, %p97
      %s99 = ssub.s32 %s18, %s25
      %p100 = scmp.eq.s32.totalorder %s99, 0
      %s102 = sadd.s32 %s101, 1
      %s103 = scalar_select %p100, %s101, %s102
      %p106 = pneg %p100
      %p107 = scmp.eq.s32.totalorder %s18, 1
      %p108 = por %p106, %p107
      %p109 = scmp.ne.s32.totalorder %s101, %s104
      %p110 = scmp.eq.s32.totalorder %s18, 0
      %p111 = por %p109, %p110
      %p112 = scmp.ne.s32.totalorder %s101, %s104
      %p113 = scmp.eq.s32.totalorder %s23, 1
      %p114 = por %p112, %p113
      %p115 = scmp.ne.s32.totalorder %s104, %s105
      %p116 = scmp.eq.s32.totalorder %s23, 0
      %p117 = por %p115, %p116
      %p118 = scmp.ne.s32.totalorder %s104, %s105
      %p119 = scmp.eq.s32.totalorder %s24, 1
      %p120 = por %p118, %p119
      %p122 = scmp.ne.s32.totalorder %s105, %s121
      %p123 = scmp.eq.s32.totalorder %s24, 0
      %p124 = por %p122, %p123
      %p125 = scmp.le.s32.totalorder 1, %s18
      %p126 = scmp.lt.s32.totalorder %s18, 3
      %p127 = pnand %p125, %p126
      %p128 = pneg %p127
      // Predicated region
      $region9: #{tpu_custom_call.1} parent=5 // pred_check
        _
      $region10: #{tpu_custom_call.1} parent=5 // pred_check_branch
        %130 = sbr.rel (%p127) target = $region12
      $region11: #{tpu_custom_call.1} parent=5 // pred_region
        %s131 = ssub.s32 %s18, 1
        // Predicated region
        $region13: #{tpu_custom_call.1} parent=11 // pred_check
          %p132 = pneg %p91
        $region14: #{tpu_custom_call.1} parent=11 // pred_check_branch
          %134 = sbr.rel (%p132) target = $region16
        $region15: #{tpu_custom_call.1} parent=11 // pred_region
          _
        $region16: #{tpu_custom_call.1} parent=11 // pred_fallthru
          _
      $region12: #{tpu_custom_call.1} parent=5 // pred_fallthru
        _
      %p135 = scmp.lt.s32.totalorder %s18, 2
      // Predicated region
      $region17: #{tpu_custom_call.1} parent=5 // pred_check
        %p136 = pneg %p135
      $region18: #{tpu_custom_call.1} parent=5 // pred_check_branch
        %138 = sbr.rel (%p136) target = $region20
      $region19: #{tpu_custom_call.1} parent=5 // pred_region
        // Predicated region
        $region21: #{tpu_custom_call.1} parent=19 // pred_check
          %p139 = pneg %p38
        $region22: #{tpu_custom_call.1} parent=19 // pred_check_branch
          %141 = sbr.rel (%p139) target = $region24
        $region23: #{tpu_custom_call.1} parent=19 // pred_region
          %s142 = sand.u32 %s28, 1
          %s143 = scalar_lea.sflag [#allocation3], %s142
          %s144 = sand.u32 %s28, 1
          %s145 = smul.addr %s144, 4
          %s146 = scalar_lea.vmem [#allocation2], %s145
          %s147 = smul.u32 2, %s18
          %s149 = ssub.s32 64, 64
          %150 = vsyncadd %s143, %s149
          %s151 = smul.addr %s147, 32
          %s152 = scalar_lea.hbm %s0, %s151
          %s153 = sshll.u32 %s146, 4
          %s154 = int_to_ptr.vmem [resolvable:$true] %s153
          %159 = dma.hbm_to_vmem [thread:$0]  %s152, 64, %s154, %s143, 32, 32, 2
        $region24: #{tpu_custom_call.1} parent=19 // pred_fallthru
          _
        // Predicated region
        $region25: #{tpu_custom_call.1} parent=19 // pred_check
          %p160 = pneg %p64
        $region26: #{tpu_custom_call.1} parent=19 // pred_check_branch
          %162 = sbr.rel (%p160) target = $region28
        $region27: #{tpu_custom_call.1} parent=19 // pred_region
          %s163 = sand.u32 %s54, 1
          %s164 = scalar_lea.sflag [#allocation6], %s163
          %s165 = sand.u32 %s54, 1
          %s166 = smul.addr %s165, 16
          %s167 = scalar_lea.vmem [#allocation5], %s166
          %s168 = smul.u32 2, %s18
          %s170 = ssub.s32 256, 256
          %171 = vsyncadd %s164, %s170
          %s172 = smul.addr %s168, 2
          %s173 = smul.addr %s172, 64
          %s174 = scalar_lea.hbm %s1, %s173
          %s175 = sshll.u32 %s167, 4
          %s176 = int_to_ptr.vmem [resolvable:$true] %s175
          %181 = dma.hbm_to_vmem [thread:$0]  %s174, 256, %s176, %s164, 64, 64, 4
        $region28: #{tpu_custom_call.1} parent=19 // pred_fallthru
          _
      $region20: #{tpu_custom_call.1} parent=5 // pred_fallthru
        _
      %p182 = scmp.le.s32.totalorder 1, %s18
      %p183 = scmp.lt.s32.totalorder %s18, 3
      %p184 = pnand %p182, %p183
      %p185 = pneg %p184
      // Predicated region
      $region29: #{tpu_custom_call.1} parent=5 // pred_check
        _
      $region30: #{tpu_custom_call.1} parent=5 // pred_check_branch
        %187 = sbr.rel (%p184) target = $region32
      $region31: #{tpu_custom_call.1} parent=5 // pred_region
        %s188 = ssub.s32 %s18, 1
        %s189 = sand.u32 %s31, 1
        %s190 = scalar_lea.sflag [#allocation3], %s189
        %s191 = sand.u32 %s31, 1
        %s192 = smul.addr %s191, 4
        %s193 = scalar_lea.vmem [#allocation2], %s192
        // Predicated region
        $region33: #{tpu_custom_call.1} parent=31 // pred_check
          %p194 = pneg %p44
        $region34: #{tpu_custom_call.1} parent=31 // pred_check_branch
          %196 = sbr.rel (%p194) target = $region36
        $region35: #{tpu_custom_call.1} parent=31 // pred_region
          %197 = dma.done %s190, 64
        $region36: #{tpu_custom_call.1} parent=31 // pred_fallthru
          _
        %s198 = sand.u32 %s57, 1
        %s199 = scalar_lea.sflag [#allocation6], %s198
        %s200 = sand.u32 %s57, 1
        %s201 = smul.addr %s200, 16
        %s202 = scalar_lea.vmem [#allocation5], %s201
        // Predicated region
        $region37: #{tpu_custom_call.1} parent=31 // pred_check
          %p203 = pneg %p70
        $region38: #{tpu_custom_call.1} parent=31 // pred_check_branch
          %205 = sbr.rel (%p203) target = $region40
        $region39: #{tpu_custom_call.1} parent=31 // pred_region
          %206 = dma.done %s199, 256
        $region40: #{tpu_custom_call.1} parent=31 // pred_fallthru
          _
        %s207 = sand.u32 %s31, 1
        %s208 = scalar_lea.sflag [#allocation3], %s207
        %s209 = sand.u32 %s31, 1
        %s210 = smul.addr %s209, 4
        %s211 = scalar_lea.vmem [#allocation2], %s210
        %p212 = pneg %p44
        %p213 = pneg %p41
        %s214 = sand.u32 %s57, 1
        %s215 = scalar_lea.sflag [#allocation6], %s214
        %s216 = sand.u32 %s57, 1
        %s217 = smul.addr %s216, 16
        %s218 = scalar_lea.vmem [#allocation5], %s217
        %p219 = pneg %p70
        %p220 = pneg %p67
        %p221 = pneg %p91
        %p222 = pneg %p88
        %p223 = pneg %p117
        %p224 = pneg %p114
        %s225 = sand.u32 %s104, 1
        %s226 = scalar_lea.sflag [#allocation4], %s225
        %s227 = sand.u32 %s104, 1
        %s228 = smul.addr %s227, 2
        %s229 = scalar_lea.vmem [#allocation7], %s228
        %s230 = smul.u32 2, %s23
        %s231 = smul.u32 2, %s23
        %s232 = smul.u32 2, %s23
        %v234 = vlaneseq
        %v235 = vshrl.u32 %v234, 7
        %v236 = vadd.s32 %v235, 8
        %v237 = vld [vmem:[%s2] sm:$0x1]
        %v238 = vld [vmem:[%s202] sm:$0xf]
        %v239 = vld [vmem:[%s202 + $0x4] sm:$0xf]
        %v240 = vld [vmem:[%s193] sm:$0x3]
        %v243 = vunpack.c.l.b16 %v238
        %v244 = vunpack.c.l.b16 %v239
        %v245 = vpack.c.b16 %v244, %v243
        %vm246 = vcmask 261120
        %v248 = vsel %vm246, %v237, 0
        %v251 = vsel %vm246, %v245, 0
        %253 = vmatprep.subr.bf16.mxu0 0
        %254 = vmatpush1.bf16.xpose.msra.mxu0 0
        %255 = vmatprep.subr.bf16.mxu0 0
        %256 = vmatpush1.bf16.xpose.msra.mxu0 0
        %257 = vmatprep.subr.bf16.mxu0 0
        %258 = vmatpush1.bf16.xpose.msra.mxu0 0
        %259 = vmatprep.subr.bf16.mxu0 0
        %260 = vmatpush1.bf16.xpose.msra.mxu0 0
        %261 = vmatprep.subr.bf16.mxu0 0
        %262 = vmatpush1.bf16.xpose.msra.mxu0 0
        %263 = vmatprep.subr.bf16.mxu0 0
        %264 = vmatpush1.bf16.xpose.msra.mxu0 0
        %265 = vmatprep.subr.bf16.mxu0 0
        %266 = vmatpush1.bf16.xpose.msra.mxu0 0
        %267 = vmatprep.subr.bf16.mxu0 0
        %268 = vmatpush1.bf16.xpose.msra.mxu0 %v251
        %269 = vmatprep.subr.bf16.mxu0 0
        %270 = vmatpush2.bf16.xpose.msra.mxu0 0
        %271 = vmatprep.subr.bf16.mxu0 0
        %272 = vmatpush2.bf16.xpose.msra.mxu0 0
        %273 = vmatprep.subr.bf16.mxu0 0
        %274 = vmatpush2.bf16.xpose.msra.mxu0 0
        %275 = vmatprep.subr.bf16.mxu0 0
        %276 = vmatpush2.bf16.xpose.msra.mxu0 0
        %277 = vmatprep.subr.bf16.mxu0 0
        %278 = vmatpush2.bf16.xpose.msra.mxu0 0
        %279 = vmatprep.subr.bf16.mxu0 0
        %280 = vmatpush2.bf16.xpose.msra.mxu0 0
        %281 = vmatprep.subr.bf16.mxu0 0
        %282 = vmatpush2.bf16.xpose.msra.mxu0 0
        %283 = vmatprep.subr.bf16.mxu0 0
        %284 = vmatpush2.bf16.xpose.msra.mxu0 0
        %285 = vmatprep.mubr.bf16.mxu0 0
        %286 = vmatmul.mubr.bf16.gmra.mxu0 %v248
        %v287 = vpop.f32.mrf.mxu0
        %v288 = vadd.f32 0.0, %v287
        %v289 = vpop.f32.mrf.mxu0
        %v290 = vpop.f32.mrf.mxu0
        %v291 = vpop.f32.mrf.mxu0
        %292 = vdwg.mxu0
        %v293 = vlaneseq
        %v294 = vshrl.u32 %v293, 7
        %v295 = vsub.s32 0, %v294
        %v296 = vrot.slane %v240, %v295
        %vm297 = vcmp.ge.s32.totalorder %v235, %v296
        %vm298 = vcmp.ge.s32.totalorder %v236, %v296
        %v299 = vlaneseq
        %v300 = vshrl.u32 %v299, 7
        %v301 = vsub.s32 1, %v300
        %v302 = vrot.slane %v240, %v301
        %vm303 = vcmp.le.s32.totalorder %v235, %v302
        %vm304 = vcmp.le.s32.totalorder %v236, %v302
        %vm305 = vmand %vm297, %vm303
        %vm306 = vmand %vm298, %vm304
        %v307 = vsel %vm305, 1, 0
        %v308 = vsel %vm306, 1, 0
        %v309 = vcvt.s32.f32 %v307
        %v310 = vcvt.s32.f32 %v308
        %vm311 = vcmask 130048
        %v313 = vsel %vm311, %v288, 0
        %315 = vmatprep.subr.mxu0 0.0
        %316 = vmatpush1.msra.mxu0 0.0
        %317 = vmatprep.subr.mxu0 0.0
        %318 = vmatpush1.msra.mxu0 0.0
        %319 = vmatprep.subr.mxu0 0.0
        %320 = vmatpush1.msra.mxu0 0.0
        %321 = vmatprep.subr.mxu0 0.0
        %322 = vmatpush1.msra.mxu0 0.0
        %323 = vmatprep.subr.mxu0 0.0
        %324 = vmatpush1.msra.mxu0 0.0
        %325 = vmatprep.subr.mxu0 0.0
        %326 = vmatpush1.msra.mxu0 0.0
        %327 = vmatprep.subr.mxu0 0.0
        %328 = vmatpush1.msra.mxu0 0.0
        %329 = vmatprep.subr.mxu0 0.0
        %330 = vmatpush1.msra.mxu0 0.0
        %331 = vmatprep.subr.mxu0 0.0
        %332 = vmatpush1.msra.mxu0 0.0
        %333 = vmatprep.subr.mxu0 0.0
        %334 = vmatpush1.msra.mxu0 0.0
        %335 = vmatprep.subr.mxu0 0.0
        %336 = vmatpush1.msra.mxu0 0.0
        %337 = vmatprep.subr.mxu0 0.0
        %338 = vmatpush1.msra.mxu0 0.0
        %339 = vmatprep.subr.mxu0 0.0
        %340 = vmatpush1.msra.mxu0 0.0
        %341 = vmatprep.subr.mxu0 0.0
        %342 = vmatpush1.msra.mxu0 0.0
        %343 = vmatprep.subr.mxu0 0.0
        %344 = vmatpush1.msra.mxu0 %v310
        %345 = vmatprep.subr.mxu0 0.0
        %346 = vmatpush1.msra.mxu0 %v309
        %347 = vmatprep.subr.mxu0 0.0
        %348 = vmatpush2.msra.mxu0 0.0
        %349 = vmatprep.subr.mxu0 0.0
        %350 = vmatpush2.msra.mxu0 0.0
        %351 = vmatprep.subr.mxu0 0.0
        %352 = vmatpush2.msra.mxu0 0.0
        %353 = vmatprep.subr.mxu0 0.0
        %354 = vmatpush2.msra.mxu0 0.0
        %355 = vmatprep.subr.mxu0 0.0
        %356 = vmatpush2.msra.mxu0 0.0
        %357 = vmatprep.subr.mxu0 0.0
        %358 = vmatpush2.msra.mxu0 0.0
        %359 = vmatprep.subr.mxu0 0.0
        %360 = vmatpush2.msra.mxu0 0.0
        %361 = vmatprep.subr.mxu0 0.0
        %362 = vmatpush2.msra.mxu0 0.0
        %363 = vmatprep.subr.mxu0 0.0
        %364 = vmatpush2.msra.mxu0 0.0
        %365 = vmatprep.subr.mxu0 0.0
        %366 = vmatpush2.msra.mxu0 0.0
        %367 = vmatprep.subr.mxu0 0.0
        %368 = vmatpush2.msra.mxu0 0.0
        %369 = vmatprep.subr.mxu0 0.0
        %370 = vmatpush2.msra.mxu0 0.0
        %371 = vmatprep.subr.mxu0 0.0
        %372 = vmatpush2.msra.mxu0 0.0
        %373 = vmatprep.subr.mxu0 0.0
        %374 = vmatpush2.msra.mxu0 0.0
        %375 = vmatprep.subr.mxu0 0.0
        %376 = vmatpush2.msra.mxu0 0.0
        %377 = vmatprep.subr.mxu0 0.0
        %378 = vmatpush2.msra.mxu0 0.0
        %379 = vmatprep.mubr.f32.mxu0 0.0
        %380 = vmatmul.mubr.f32.gmra.mxu0 %v313
        %v381 = vpop.f32.mrf.mxu0
        %v382 = vadd.f32 0.0, %v381
        %v383 = vpop.f32.mrf.mxu0
        %384 = vdwg.mxu0
        %v385 = vrot.slane %v240, 7
        %v386 = vsub.s32 %v240, %v385
        %v387 = vadd.s32 %v386, 1
        %v388 = vcvt.s32.f32 %v387
        %v389 = vrcp.pop %v388
        %v390 = vmul.f32 1.0, %v389
        %v392 = vrot.slane %v390, 1
        %v394 = vmul.f32 %v382, %v392
        %395 = vst [vmem:[%s229] sm:$0x1] %v394
        %s396 = scalar_lea.vmem %s202, 8 [#allocation5]
        %v397 = vld [vmem:[%s396] sm:$0xf]
        %v398 = vld [vmem:[%s396 + $0x4] sm:$0xf]
        %s399 = scalar_lea.vmem %s193, 2 [#allocation2]
        %v400 = vld [vmem:[%s399] sm:$0x3]
        %v403 = vunpack.c.l.b16 %v397
        %v404 = vunpack.c.l.b16 %v398
        %v405 = vpack.c.b16 %v404, %v403
        %v407 = vsel %vm246, %v405, 0
        %409 = vmatprep.subr.bf16.mxu0 0
        %410 = vmatpush1.bf16.xpose.msra.mxu0 0
        %411 = vmatprep.subr.bf16.mxu0 0
        %412 = vmatpush1.bf16.xpose.msra.mxu0 0
        %413 = vmatprep.subr.bf16.mxu0 0
        %414 = vmatpush1.bf16.xpose.msra.mxu0 0
        %415 = vmatprep.subr.bf16.mxu0 0
        %416 = vmatpush1.bf16.xpose.msra.mxu0 0
        %417 = vmatprep.subr.bf16.mxu0 0
        %418 = vmatpush1.bf16.xpose.msra.mxu0 0
        %419 = vmatprep.subr.bf16.mxu0 0
        %420 = vmatpush1.bf16.xpose.msra.mxu0 0
        %421 = vmatprep.subr.bf16.mxu0 0
        %422 = vmatpush1.bf16.xpose.msra.mxu0 0
        %423 = vmatprep.subr.bf16.mxu0 0
        %424 = vmatpush1.bf16.xpose.msra.mxu0 %v407
        %425 = vmatprep.subr.bf16.mxu0 0
        %426 = vmatpush2.bf16.xpose.msra.mxu0 0
        %427 = vmatprep.subr.bf16.mxu0 0
        %428 = vmatpush2.bf16.xpose.msra.mxu0 0
        %429 = vmatprep.subr.bf16.mxu0 0
        %430 = vmatpush2.bf16.xpose.msra.mxu0 0
        %431 = vmatprep.subr.bf16.mxu0 0
        %432 = vmatpush2.bf16.xpose.msra.mxu0 0
        %433 = vmatprep.subr.bf16.mxu0 0
        %434 = vmatpush2.bf16.xpose.msra.mxu0 0
        %435 = vmatprep.subr.bf16.mxu0 0
        %436 = vmatpush2.bf16.xpose.msra.mxu0 0
        %437 = vmatprep.subr.bf16.mxu0 0
        %438 = vmatpush2.bf16.xpose.msra.mxu0 0
        %439 = vmatprep.subr.bf16.mxu0 0
        %440 = vmatpush2.bf16.xpose.msra.mxu0 0
        %441 = vmatprep.mubr.bf16.mxu0 0
        %442 = vmatmul.mubr.bf16.gmra.mxu0 %v248
        %v443 = vpop.f32.mrf.mxu0
        %v444 = vadd.f32 0.0, %v443
        %v445 = vpop.f32.mrf.mxu0
        %v446 = vpop.f32.mrf.mxu0
        %v447 = vpop.f32.mrf.mxu0
        %448 = vdwg.mxu0
        %v449 = vlaneseq
        %v450 = vshrl.u32 %v449, 7
        %v451 = vsub.s32 0, %v450
        %v452 = vrot.slane %v400, %v451
        %vm453 = vcmp.ge.s32.totalorder %v235, %v452
        %vm454 = vcmp.ge.s32.totalorder %v236, %v452
        %v455 = vlaneseq
        %v456 = vshrl.u32 %v455, 7
        %v457 = vsub.s32 1, %v456
        %v458 = vrot.slane %v400, %v457
        %vm459 = vcmp.le.s32.totalorder %v235, %v458
        %vm460 = vcmp.le.s32.totalorder %v236, %v458
        %vm461 = vmand %vm453, %vm459
        %vm462 = vmand %vm454, %vm460
        %v463 = vsel %vm461, 1, 0
        %v464 = vsel %vm462, 1, 0
        %v465 = vcvt.s32.f32 %v463
        %v466 = vcvt.s32.f32 %v464
        %v468 = vsel %vm311, %v444, 0
        %470 = vmatprep.subr.mxu0 0.0
        %471 = vmatpush1.msra.mxu0 0.0
        %472 = vmatprep.subr.mxu0 0.0
        %473 = vmatpush1.msra.mxu0 0.0
        %474 = vmatprep.subr.mxu0 0.0
        %475 = vmatpush1.msra.mxu0 0.0
        %476 = vmatprep.subr.mxu0 0.0
        %477 = vmatpush1.msra.mxu0 0.0
        %478 = vmatprep.subr.mxu0 0.0
        %479 = vmatpush1.msra.mxu0 0.0
        %480 = vmatprep.subr.mxu0 0.0
        %481 = vmatpush1.msra.mxu0 0.0
        %482 = vmatprep.subr.mxu0 0.0
        %483 = vmatpush1.msra.mxu0 0.0
        %484 = vmatprep.subr.mxu0 0.0
        %485 = vmatpush1.msra.mxu0 0.0
        %486 = vmatprep.subr.mxu0 0.0
        %487 = vmatpush1.msra.mxu0 0.0
        %488 = vmatprep.subr.mxu0 0.0
        %489 = vmatpush1.msra.mxu0 0.0
        %490 = vmatprep.subr.mxu0 0.0
        %491 = vmatpush1.msra.mxu0 0.0
        %492 = vmatprep.subr.mxu0 0.0
        %493 = vmatpush1.msra.mxu0 0.0
        %494 = vmatprep.subr.mxu0 0.0
        %495 = vmatpush1.msra.mxu0 0.0
        %496 = vmatprep.subr.mxu0 0.0
        %497 = vmatpush1.msra.mxu0 0.0
        %498 = vmatprep.subr.mxu0 0.0
        %499 = vmatpush1.msra.mxu0 %v466
        %500 = vmatprep.subr.mxu0 0.0
        %501 = vmatpush1.msra.mxu0 %v465
        %502 = vmatprep.subr.mxu0 0.0
        %503 = vmatpush2.msra.mxu0 0.0
        %504 = vmatprep.subr.mxu0 0.0
        %505 = vmatpush2.msra.mxu0 0.0
        %506 = vmatprep.subr.mxu0 0.0
        %507 = vmatpush2.msra.mxu0 0.0
        %508 = vmatprep.subr.mxu0 0.0
        %509 = vmatpush2.msra.mxu0 0.0
        %510 = vmatprep.subr.mxu0 0.0
        %511 = vmatpush2.msra.mxu0 0.0
        %512 = vmatprep.subr.mxu0 0.0
        %513 = vmatpush2.msra.mxu0 0.0
        %514 = vmatprep.subr.mxu0 0.0
        %515 = vmatpush2.msra.mxu0 0.0
        %516 = vmatprep.subr.mxu0 0.0
        %517 = vmatpush2.msra.mxu0 0.0
        %518 = vmatprep.subr.mxu0 0.0
        %519 = vmatpush2.msra.mxu0 0.0
        %520 = vmatprep.subr.mxu0 0.0
        %521 = vmatpush2.msra.mxu0 0.0
        %522 = vmatprep.subr.mxu0 0.0
        %523 = vmatpush2.msra.mxu0 0.0
        %524 = vmatprep.subr.mxu0 0.0
        %525 = vmatpush2.msra.mxu0 0.0
        %526 = vmatprep.subr.mxu0 0.0
        %527 = vmatpush2.msra.mxu0 0.0
        %528 = vmatprep.subr.mxu0 0.0
        %529 = vmatpush2.msra.mxu0 0.0
        %530 = vmatprep.subr.mxu0 0.0
        %531 = vmatpush2.msra.mxu0 0.0
        %532 = vmatprep.subr.mxu0 0.0
        %533 = vmatpush2.msra.mxu0 0.0
        %534 = vmatprep.mubr.f32.mxu0 0.0
        %535 = vmatmul.mubr.f32.gmra.mxu0 %v468
        %v536 = vpop.f32.mrf.mxu0
        %v537 = vadd.f32 0.0, %v536
        %v538 = vpop.f32.mrf.mxu0
        %539 = vdwg.mxu0
        %v540 = vrot.slane %v400, 7
        %v541 = vsub.s32 %v400, %v540
        %v542 = vadd.s32 %v541, 1
        %v543 = vcvt.s32.f32 %v542
        %v544 = vrcp.pop %v543
        %v545 = vmul.f32 1.0, %v544
        %v547 = vrot.slane %v545, 1
        %v549 = vmul.f32 %v537, %v547
        %s550 = scalar_lea.vmem %s229, 1 [#allocation7]
        %551 = vst [vmem:[%s550] sm:$0x1] %v549
        %s552 = sand.u32 %s104, 1
        %s553 = scalar_lea.sflag [#allocation4], %s552
        %s554 = sand.u32 %s104, 1
        %s555 = smul.addr %s554, 2
        %s556 = scalar_lea.vmem [#allocation7], %s555
        // Predicated region
        $region41: #{tpu_custom_call.1} parent=31 // pred_check
          %p557 = pneg %p114
        $region42: #{tpu_custom_call.1} parent=31 // pred_check_branch
          %559 = sbr.rel (%p557) target = $region44
        $region43: #{tpu_custom_call.1} parent=31 // pred_region
          %s560 = smul.u32 2, %s23
          %s562 = ssub.s32 32, 32
          %563 = vsyncadd %s553, %s562
          %s564 = smul.addr %s560, 16
          %s565 = scalar_lea.hbm %s3, %s564
          %s566 = sshll.u32 %s556, 4
          %s567 = int_to_ptr.vmem [resolvable:$true] %s566
          %572 = dma.vmem_to_hbm [thread:$0]  %s567, 32, %s565, %s553, 16, 16, 1
        $region44: #{tpu_custom_call.1} parent=31 // pred_fallthru
          _
      $region32: #{tpu_custom_call.1} parent=5 // pred_fallthru
        _
      %p573 = scmp.le.s32.totalorder 2, %s18
      // Predicated region
      $region45: #{tpu_custom_call.1} parent=5 // pred_check
        %p574 = pneg %p573
      $region46: #{tpu_custom_call.1} parent=5 // pred_check_branch
        %576 = sbr.rel (%p574) target = $region48
      $region47: #{tpu_custom_call.1} parent=5 // pred_region
        %s577 = ssub.s32 %s18, 2
        // Predicated region
        $region49: #{tpu_custom_call.1} parent=47 // pred_check
          %p578 = pneg %p120
        $region50: #{tpu_custom_call.1} parent=47 // pred_check_branch
          %580 = sbr.rel (%p578) target = $region52
        $region51: #{tpu_custom_call.1} parent=47 // pred_region
          %s581 = sand.u32 %s105, 1
          %s582 = scalar_lea.sflag [#allocation4], %s581
          %s583 = sand.u32 %s105, 1
          %s584 = smul.addr %s583, 2
          %s585 = scalar_lea.vmem [#allocation7], %s584
          %586 = dma.done %s582, 32
        $region52: #{tpu_custom_call.1} parent=47 // pred_fallthru
          _
      $region48: #{tpu_custom_call.1} parent=5 // pred_fallthru
        _
    $region6: #{tpu_custom_call.1} parent=1 // loop_footer
      %s22 = sadd.s32 1, %s18
    $region7: #{tpu_custom_call.1} parent=1 // loop_footer_branch
      %17 = sbr.rel target = $region3
    $region8: #{tpu_custom_call.1} parent=1 // loop_exit
      _
    %587 = vsyncpa [#allocation3], 1
    %s588 = scalar_lea.sflag [#allocation3], 1
    %589 = vsyncpa %s588, 1
    %590 = vsyncpa [#allocation6], 1
    %s591 = scalar_lea.sflag [#allocation6], 1
    %592 = vsyncpa %s591, 1
    %593 = vsyncpa [#allocation4], 1
    %s594 = scalar_lea.sflag [#allocation4], 1
    %595 = vsyncpa %s594, 1

</llo_original>
